<compile_context>
chip_gen: v7x
topology: tpu7x:2x2x1
jax: 0.10.0
libtpu: 0.0.40
codegen_flags: <defaults>
</compile_context>

<pallas_src>
import jax
import jax.numpy as jnp
from jax.experimental import pallas as pl
from jax.experimental.pallas import tpu as pltpu


def _round_up(x, m):
    return ((x + m - 1) // m) * m


def bert_output_kernel(h_ref, w_ref, b_ref, res_ref, o_ref):
    # h_ref:   (tm, I)  bf16 tile of flattened hidden_states
    # w_ref:   (I,  H)  bf16 transposed dense weight (resident, single-buffered)
    # b_ref:   (1,  H)  f32 dense bias (resident, single-buffered)
    # res_ref: (tm, H)  residual tile (input_tensor)
    # o_ref:   (tm, H)  output tile
    y = jnp.dot(h_ref[...], w_ref[...], preferred_element_type=jnp.float32)
    y = y + b_ref[...].astype(jnp.float32)
    # TODO(synk): nn.Dropout is identity at inference; training-mode random
    # masking (pltpu.prng_seed + pltpu.prng_random_bits) is not implemented.
    o_ref[...] = (y + res_ref[...].astype(jnp.float32)).astype(o_ref.dtype)


def bert_output_without_layernorm(hidden_states, input_tensor, w_t, bias, *, tm=512):
    """hidden_states: [B, S, I], input_tensor: [B, S, H], w_t: [I, H], bias: [H]."""
    B, S, I = hidden_states.shape
    H = input_tensor.shape[-1]
    M = B * S
    out_dtype = input_tensor.dtype

    # bf16 matmul operands (f32 accumulation inside the kernel).
    h2 = hidden_states.reshape(M, I).astype(jnp.bfloat16)
    w_bf16 = w_t.astype(jnp.bfloat16)
    r2 = input_tensor.reshape(M, H)
    b2 = bias.astype(jnp.float32).reshape(1, H)

    # Row tile: big (MXU / pipeline friendly), 8-sublane aligned, clamped to M;
    # pad M so the grid divides evenly (padded rows are sliced off at the end).
    tm_eff = min(tm, _round_up(M, 8))
    M_pad = _round_up(M, tm_eff)
    if M_pad != M:
        h2 = jnp.pad(h2, ((0, M_pad - M), (0, 0)))
        r2 = jnp.pad(r2, ((0, M_pad - M), (0, 0)))
    grid = (M_pad // tm_eff,)

    # Explicit VMEM budget: 1x resident weight/bias + 2x (double-buffered)
    # activation / residual / output tiles, with ~1.5x headroom, clamped so it
    # stays inside every chip's physical VMEM (v7x has 64 MiB per TensorCore).
    bytes_weight = I * H * 2 + H * 4
    bytes_tiles = 2 * (tm_eff * I * 2
                       + tm_eff * H * r2.dtype.itemsize
                       + tm_eff * H * jnp.dtype(out_dtype).itemsize)
    vmem_limit = int(min(60 * 1024 * 1024,
                         max(32 * 1024 * 1024, 1.5 * (bytes_weight + bytes_tiles))))

    out2 = pl.pallas_call(
        bert_output_kernel,
        out_shape=jax.ShapeDtypeStruct((M_pad, H), out_dtype),
        grid_spec=pl.GridSpec(
            grid=grid,
            in_specs=[
                pl.BlockSpec((tm_eff, I), lambda i: (i, 0)),        # activations tile
                pl.BlockSpec((I, H), lambda i: (0, 0),
                             pipeline_mode=pl.Buffered(1)),          # resident weight
                pl.BlockSpec((1, H), lambda i: (0, 0),
                             pipeline_mode=pl.Buffered(1)),          # resident bias
                pl.BlockSpec((tm_eff, H), lambda i: (i, 0)),         # residual tile
            ],
            out_specs=pl.BlockSpec((tm_eff, H), lambda i: (i, 0)),
        ),
        compiler_params=pltpu.CompilerParams(
            dimension_semantics=("parallel",),
            vmem_limit_bytes=vmem_limit),
    )(h2, w_bf16, b2, r2)

    return out2[:M].reshape(B, S, H)


def reference(hidden_states, input_tensor, w_t, bias):
    y = jnp.einsum("bsi,ih->bsh", hidden_states, w_t) + bias
    return y + input_tensor


if __name__ == "__main__":
    # Small, lane-aligned shapes implied by the module:
    # batch=2, seq=8, intermediate_size=256, hidden_size=128.
    B, S, I, H = 2, 8, 256, 128

    key = jax.random.PRNGKey(0)
    k_h, k_r, k_w, k_b = jax.random.split(key, 4)

    hidden_states = jax.random.normal(k_h, (B, S, I), dtype=jnp.float32)
    input_tensor = jax.random.normal(k_r, (B, S, H), dtype=jnp.float32)

    # nn.Linear(I, H): weight [H, I], bias [H]; kernel takes the transpose [I, H].
    w = jax.random.normal(k_w, (H, I), dtype=jnp.float32) * 0.02
    bias = jax.random.normal(k_b, (H,), dtype=jnp.float32) * 0.02
    w_t = w.T

    out = bert_output_without_layernorm(hidden_states, input_tensor, w_t, bias)
    out = jax.block_until_ready(out)

    ref = reference(hidden_states, input_tensor, w_t, bias)
    assert out.shape == (B, S, H)
    # bf16 matmul inputs with f32 accumulation -> loosened tolerance vs pure f32.
    assert jnp.allclose(out, ref, atol=2e-2, rtol=2e-2), "mismatch vs reference"

    print("KERNEL_OK")
</pallas_src>

<mosaic_0001>
module attributes {stable_mosaic.version = 11 : i64} {
  func.func @bert_output_kernel(%arg0: i32, %arg1: memref<16x256xbf16, #tpu.memory_space<vmem>>, %arg2: memref<256x128xbf16, #tpu.memory_space<vmem>>, %arg3: memref<1x128xf32, #tpu.memory_space<vmem>>, %arg4: memref<16x128xf32, #tpu.memory_space<vmem>>, %arg5: memref<16x128xf32, #tpu.memory_space<vmem>>) attributes {dimension_semantics = [#tpu.dimension_semantics<parallel>], iteration_bounds = array<i64: 1>, scalar_prefetch = 0 : i64, scratch_operands = 0 : i64, tpu.core_type = #tpu.core_type<tc>, window_params = [{transform_indices = @transform_0, window_bounds = array<i64: 16, 256>}, {pipeline_mode = #tpu.pipeline_mode<synchronous>, transform_indices = @transform_1, window_bounds = array<i64: 256, 128>}, {pipeline_mode = #tpu.pipeline_mode<synchronous>, transform_indices = @transform_2, window_bounds = array<i64: 1, 128>}, {transform_indices = @transform_3, window_bounds = array<i64: 16, 128>}, {transform_indices = @transform_4, window_bounds = array<i64: 16, 128>}]} {
    %c0 = arith.constant 0 : index
    %c0_0 = arith.constant 0 : index
    %0 = vector.load %arg1[%c0, %c0_0] : memref<16x256xbf16, #tpu.memory_space<vmem>>, vector<16x256xbf16>
    %c0_1 = arith.constant 0 : index
    %c0_2 = arith.constant 0 : index
    %1 = vector.load %arg2[%c0_1, %c0_2] : memref<256x128xbf16, #tpu.memory_space<vmem>>, vector<256x128xbf16>
    %cst = arith.constant dense<0.000000e+00> : vector<16x128xf32>
    %2 = tpu.matmul %0, %1, %cst {dimension_numbers = #tpu.dot_dimension_numbers<[1], [0], [0], [1], [0, 0, 1, 1], [], []>} : vector<16x256xbf16>, vector<256x128xbf16>, vector<16x128xf32> -> vector<16x128xf32>
    %c0_3 = arith.constant 0 : index
    %c0_4 = arith.constant 0 : index
    %3 = vector.load %arg3[%c0_3, %c0_4] : memref<1x128xf32, #tpu.memory_space<vmem>>, vector<1x128xf32>
    %4 = vector.broadcast %3 : vector<1x128xf32> to vector<16x128xf32>
    %5 = arith.addf %2, %4 : vector<16x128xf32>
    %c0_5 = arith.constant 0 : index
    %c0_6 = arith.constant 0 : index
    %6 = vector.load %arg4[%c0_5, %c0_6] : memref<16x128xf32, #tpu.memory_space<vmem>>, vector<16x128xf32>
    %7 = arith.addf %5, %6 : vector<16x128xf32>
    %c0_7 = arith.constant 0 : index
    %c0_8 = arith.constant 0 : index
    %8 = vector.load %arg5[%c0_7, %c0_8] : memref<16x128xf32, #tpu.memory_space<vmem>>, vector<16x128xf32>
    tpu.vector_store %arg5[%c0_7, %c0_8], %7 {strides = array<i32>} : memref<16x128xf32, #tpu.memory_space<vmem>>, vector<16x128xf32>,
    return
  }
  func.func @transform_0(%arg0: i32) -> (i32, i32) {
    %c0_i32 = arith.constant 0 : i32
    %c0_i32_0 = arith.constant 0 : i32
    return %arg0, %c0_i32 : i32, i32
  }
  func.func @transform_1(%arg0: i32) -> (i32, i32) {
    %c0_i32 = arith.constant 0 : i32
    %c0_i32_0 = arith.constant 0 : i32
    %c0_i32_1 = arith.constant 0 : i32
    return %c0_i32, %c0_i32_0 : i32, i32
  }
  func.func @transform_2(%arg0: i32) -> (i32, i32) {
    %c0_i32 = arith.constant 0 : i32
    %c0_i32_0 = arith.constant 0 : i32
    %c0_i32_1 = arith.constant 0 : i32
    return %c0_i32, %c0_i32_0 : i32, i32
  }
  func.func @transform_3(%arg0: i32) -> (i32, i32) {
    %c0_i32 = arith.constant 0 : i32
    %c0_i32_0 = arith.constant 0 : i32
    return %arg0, %c0_i32 : i32, i32
  }
  func.func @transform_4(%arg0: i32) -> (i32, i32) {
    %c0_i32 = arith.constant 0 : i32
    %c0_i32_0 = arith.constant 0 : i32
    return %arg0, %c0_i32 : i32, i32
  }
}

</mosaic_0001>

<llo_original>
// kernel: tpu_custom_call.1
$region0: #{tpu_custom_call.1}
  #allocation0 [shape = 'u32[]', space=smem, size = 0x4, offset = 0x4, fixed_abs, tag = 'smem constant byte address 0x4 - core index']
  #allocation1 [shape = 'u32[144,128]{1,0:T(1,128)}', space=vmem, size = 0x12000, scoped, tag = 'internal scratch']
  %s0 = inlined_call_operand.hbm [shape: bf16[16,256], index: 0, kind: input, shape index: {}]
  %s1 = inlined_call_operand.hbm [shape: bf16[256,128], index: 1, kind: input, shape index: {}]
  %s2 = inlined_call_operand.vmem [shape: f32[1,128], index: 2, kind: input, shape index: {}]
  %s3 = inlined_call_operand.hbm [shape: f32[16,128], index: 3, kind: input, shape index: {}]
  %s4 = inlined_call_operand.hbm [shape: f32[16,128], index: 4, kind: output, shape index: {}]
  %s5 = sld [smem:[#allocation0]]
  $region38: #{tpu_custom_call.1} parent=0
    _
  %s7 = ssub.s32 1, %s5
  %s8 = scalar_select 0, %s7, %s5
  $region1: #{tpu_custom_call.1} parent=0
    #allocation2 [shape = 'u8[8192]{0}', space=vmem, size = 0x2000, scoped, tag = 'input window, operand 0, single buffered']
    #allocation3 [shape = 's32[1]{0}', space=sflag, size = 0x4, scoped, tag = 'scoped memory for tpu_custom_call.1']
    #allocation4 [shape = 's32[1]{0}', space=sflag, size = 0x4, scoped, tag = 'scoped memory for tpu_custom_call.1']
    #allocation5 [shape = 'u8[65536]{0}', space=vmem, size = 0x10000, scoped, tag = 'input window, operand 1, single buffered']
    #allocation6 [shape = 's32[1]{0}', space=sflag, size = 0x4, scoped, tag = 'scoped memory for tpu_custom_call.1']
    #allocation7 [shape = 'u8[8192]{0}', space=vmem, size = 0x2000, scoped, tag = 'input window, operand 3, single buffered']
    #allocation8 [shape = 'u8[8192]{0}', space=vmem, size = 0x2000, scoped, tag = 'output window, operand 0, single buffered']
    %9 = vsyncpa [#allocation3], 0
    %10 = vsyncpa [#allocation6], 0
    %11 = vsyncpa [#allocation4], 0
    // Predicated region
    $region2: #{tpu_custom_call.1} parent=1 // pred_check
      _
    $region3: #{tpu_custom_call.1} parent=1 // pred_check_branch
      %13 = sbr.rel (0) target = $region5
    $region4: #{tpu_custom_call.1} parent=1 // pred_region
      %s15 = ssub.s32 256, 256
      %16 = vsyncadd [#allocation3], %s15
      %s17 = sshll.u32 [#allocation2], 4
      %s18 = int_to_ptr.vmem [resolvable:$true] %s17
      %23 = dma.hbm_to_vmem [thread:$0]  %s0, 256, %s18, [#allocation3], 128, 128, 8
    $region5: #{tpu_custom_call.1} parent=1 // pred_fallthru
      _
    // Predicated region
    $region6: #{tpu_custom_call.1} parent=1 // pred_check
      _
    $region7: #{tpu_custom_call.1} parent=1 // pred_check_branch
      %25 = sbr.rel (0) target = $region9
    $region8: #{tpu_custom_call.1} parent=1 // pred_region
      %s27 = ssub.s32 2048, 2048
      %28 = vsyncadd [#allocation6], %s27
      %s29 = sshll.u32 [#allocation5], 4
      %s30 = int_to_ptr.vmem [resolvable:$true] %s29
      %35 = dma.hbm_to_vmem [thread:$0]  %s1, 2048, %s30, [#allocation6], 64, 64, 4
    $region9: #{tpu_custom_call.1} parent=1 // pred_fallthru
      _
    // Predicated region
    $region10: #{tpu_custom_call.1} parent=1 // pred_check
      _
    $region11: #{tpu_custom_call.1} parent=1 // pred_check_branch
      %37 = sbr.rel (0) target = $region13
    $region12: #{tpu_custom_call.1} parent=1 // pred_region
      _
    $region13: #{tpu_custom_call.1} parent=1 // pred_fallthru
      _
    // Predicated region
    $region14: #{tpu_custom_call.1} parent=1 // pred_check
      _
    $region15: #{tpu_custom_call.1} parent=1 // pred_check_branch
      %39 = sbr.rel (0) target = $region17
    $region16: #{tpu_custom_call.1} parent=1 // pred_region
      %s41 = ssub.s32 256, 256
      %42 = vsyncadd [#allocation6], %s41
      %s43 = sshll.u32 [#allocation7], 4
      %s44 = int_to_ptr.vmem [resolvable:$true] %s43
      %49 = dma.hbm_to_vmem [thread:$0]  %s3, 256, %s44, [#allocation6], 128, 128, 8
    $region17: #{tpu_custom_call.1} parent=1 // pred_fallthru
      _
    // Predicated region
    $region18: #{tpu_custom_call.1} parent=1 // pred_check
      _
    $region19: #{tpu_custom_call.1} parent=1 // pred_check_branch
      %51 = sbr.rel (0) target = $region21
    $region20: #{tpu_custom_call.1} parent=1 // pred_region
      %52 = dma.done [#allocation3], 256
    $region21: #{tpu_custom_call.1} parent=1 // pred_fallthru
      _
    // Predicated region
    $region22: #{tpu_custom_call.1} parent=1 // pred_check
      _
    $region23: #{tpu_custom_call.1} parent=1 // pred_check_branch
      %54 = sbr.rel (0) target = $region25
    $region24: #{tpu_custom_call.1} parent=1 // pred_region
      %55 = dma.done [#allocation6], 2048
    $region25: #{tpu_custom_call.1} parent=1 // pred_fallthru
      _
    // Predicated region
    $region26: #{tpu_custom_call.1} parent=1 // pred_check
      _
    $region27: #{tpu_custom_call.1} parent=1 // pred_check_branch
      %57 = sbr.rel (0) target = $region29
    $region28: #{tpu_custom_call.1} parent=1 // pred_region
      %58 = dma.done [#allocation6], 256
    $region29: #{tpu_custom_call.1} parent=1 // pred_fallthru
      _
    %v60 = vld [vmem:[#allocation2] sm:$0xff]
    %v61 = vld [vmem:[#allocation2 + $0x8] sm:$0xff]
    %v62 = vld [vmem:[#allocation5] sm:$0xf]
    %v63 = vld [vmem:[#allocation5 + $0x4] sm:$0xf]
    %v64 = vld [vmem:[#allocation5 + $0x8] sm:$0xf]
    %v65 = vld [vmem:[#allocation5 + $0xc] sm:$0xf]
    %v66 = vld [vmem:[#allocation5 + $0x10] sm:$0xf]
    %v67 = vld [vmem:[#allocation5 + $0x14] sm:$0xf]
    %v68 = vld [vmem:[#allocation5 + $0x18] sm:$0xf]
    %v69 = vld [vmem:[#allocation5 + $0x1c] sm:$0xf]
    %v70 = vld [vmem:[#allocation5 + $0x20] sm:$0xf]
    %v71 = vld [vmem:[#allocation5 + $0x24] sm:$0xf]
    %v72 = vld [vmem:[#allocation5 + $0x28] sm:$0xf]
    %v73 = vld [vmem:[#allocation5 + $0x2c] sm:$0xf]
    %v74 = vld [vmem:[#allocation5 + $0x30] sm:$0xf]
    %v75 = vld [vmem:[#allocation5 + $0x34] sm:$0xf]
    %v76 = vld [vmem:[#allocation5 + $0x38] sm:$0xf]
    %v77 = vld [vmem:[#allocation5 + $0x3c] sm:$0xf]
    %v78 = vld [vmem:[#allocation5 + $0x40] sm:$0xf]
    %v79 = vld [vmem:[#allocation5 + $0x44] sm:$0xf]
    %v80 = vld [vmem:[#allocation5 + $0x48] sm:$0xf]
    %v81 = vld [vmem:[#allocation5 + $0x4c] sm:$0xf]
    %v82 = vld [vmem:[#allocation5 + $0x50] sm:$0xf]
    %v83 = vld [vmem:[#allocation5 + $0x54] sm:$0xf]
    %v84 = vld [vmem:[#allocation5 + $0x58] sm:$0xf]
    %v85 = vld [vmem:[#allocation5 + $0x5c] sm:$0xf]
    %v86 = vld [vmem:[#allocation5 + $0x60] sm:$0xf]
    %v87 = vld [vmem:[#allocation5 + $0x64] sm:$0xf]
    %v88 = vld [vmem:[#allocation5 + $0x68] sm:$0xf]
    %v89 = vld [vmem:[#allocation5 + $0x6c] sm:$0xf]
    %v90 = vld [vmem:[#allocation5 + $0x70] sm:$0xf]
    %v91 = vld [vmem:[#allocation5 + $0x74] sm:$0xf]
    %v92 = vld [vmem:[#allocation5 + $0x78] sm:$0xf]
    %v93 = vld [vmem:[#allocation5 + $0x7c] sm:$0xf]
    %v94 = vld [vmem:[%s2] sm:$0x1]
    %v96 = vlaneseq
    %v97 = vshrl.u32 %v96, 7
    %v98 = vsub.s32 0, %v97
    %v99 = vrot.slane %v94, %v98
    %v103 = vunpack.c.l.b16 %v60
    %v104 = vunpack.c.h.b16 %v60
    %v105 = vunpack.c.l.b16 %v61
    %v106 = vunpack.c.h.b16 %v61
    %v107 = vpack.c.b16 %v105, %v103
    %v108 = vpack.c.b16 %v106, %v104
    %v143 = vunpack.c.l.b16 %v62
    %v144 = vunpack.c.l.b16 %v63
    %v145 = vunpack.c.l.b16 %v64
    %v146 = vunpack.c.l.b16 %v65
    %v147 = vunpack.c.l.b16 %v66
    %v148 = vunpack.c.l.b16 %v67
    %v149 = vunpack.c.l.b16 %v68
    %v150 = vunpack.c.l.b16 %v69
    %v151 = vunpack.c.l.b16 %v70
    %v152 = vunpack.c.l.b16 %v71
    %v153 = vunpack.c.l.b16 %v72
    %v154 = vunpack.c.l.b16 %v73
    %v155 = vunpack.c.l.b16 %v74
    %v156 = vunpack.c.l.b16 %v75
    %v157 = vunpack.c.l.b16 %v76
    %v158 = vunpack.c.l.b16 %v77
    %v159 = vunpack.c.l.b16 %v78
    %v160 = vunpack.c.l.b16 %v79
    %v161 = vunpack.c.l.b16 %v80
    %v162 = vunpack.c.l.b16 %v81
    %v163 = vunpack.c.l.b16 %v82
    %v164 = vunpack.c.l.b16 %v83
    %v165 = vunpack.c.l.b16 %v84
    %v166 = vunpack.c.l.b16 %v85
    %v167 = vunpack.c.l.b16 %v86
    %v168 = vunpack.c.l.b16 %v87
    %v169 = vunpack.c.l.b16 %v88
    %v170 = vunpack.c.l.b16 %v89
    %v171 = vunpack.c.l.b16 %v90
    %v172 = vunpack.c.l.b16 %v91
    %v173 = vunpack.c.l.b16 %v92
    %v174 = vunpack.c.l.b16 %v93
    %v175 = vpack.c.b16 %v144, %v143
    %v176 = vpack.c.b16 %v146, %v145
    %v177 = vpack.c.b16 %v148, %v147
    %v178 = vpack.c.b16 %v150, %v149
    %v179 = vpack.c.b16 %v152, %v151
    %v180 = vpack.c.b16 %v154, %v153
    %v181 = vpack.c.b16 %v156, %v155
    %v182 = vpack.c.b16 %v158, %v157
    %v183 = vpack.c.b16 %v160, %v159
    %v184 = vpack.c.b16 %v162, %v161
    %v185 = vpack.c.b16 %v164, %v163
    %v186 = vpack.c.b16 %v166, %v165
    %v187 = vpack.c.b16 %v168, %v167
    %v188 = vpack.c.b16 %v170, %v169
    %v189 = vpack.c.b16 %v172, %v171
    %v190 = vpack.c.b16 %v174, %v173
    %207 = vmatprep.subr.bf16.mxu0 0
    %208 = vmatpush1.bf16.msra.mxu0 %v175
    %209 = vmatprep.subr.bf16.mxu0 0
    %210 = vmatpush1.bf16.msra.mxu0 %v176
    %211 = vmatprep.subr.bf16.mxu0 0
    %212 = vmatpush1.bf16.msra.mxu0 %v177
    %213 = vmatprep.subr.bf16.mxu0 0
    %214 = vmatpush1.bf16.msra.mxu0 %v178
    %215 = vmatprep.subr.bf16.mxu0 0
    %216 = vmatpush1.bf16.msra.mxu0 %v179
    %217 = vmatprep.subr.bf16.mxu0 0
    %218 = vmatpush1.bf16.msra.mxu0 %v180
    %219 = vmatprep.subr.bf16.mxu0 0
    %220 = vmatpush1.bf16.msra.mxu0 %v181
    %221 = vmatprep.subr.bf16.mxu0 0
    %222 = vmatpush1.bf16.msra.mxu0 %v182
    %223 = vmatprep.subr.bf16.mxu0 0
    %224 = vmatpush1.bf16.msra.mxu0 %v183
    %225 = vmatprep.subr.bf16.mxu0 0
    %226 = vmatpush1.bf16.msra.mxu0 %v184
    %227 = vmatprep.subr.bf16.mxu0 0
    %228 = vmatpush1.bf16.msra.mxu0 %v185
    %229 = vmatprep.subr.bf16.mxu0 0
    %230 = vmatpush1.bf16.msra.mxu0 %v186
    %231 = vmatprep.subr.bf16.mxu0 0
    %232 = vmatpush1.bf16.msra.mxu0 %v187
    %233 = vmatprep.subr.bf16.mxu0 0
    %234 = vmatpush1.bf16.msra.mxu0 %v188
    %235 = vmatprep.subr.bf16.mxu0 0
    %236 = vmatpush1.bf16.msra.mxu0 %v189
    %237 = vmatprep.subr.bf16.mxu0 0
    %238 = vmatpush1.bf16.msra.mxu0 %v190
    %239 = vmatprep.mubr.bf16.mxu0 %v108
    %240 = vmatmul.mubr.bf16.gmra.mrb[0].mxu0 %v107
    %v241 = vpop.f32.mrb[0].mxu0
    %v242 = vadd.f32 %v99, %v241
    %v243 = vpop.f32.mrb[0].mxu0
    %v244 = vpop.f32.mrb[0].mxu0
    %v245 = vadd.f32 %v99, %v244
    %v246 = vpop.f32.mrb[0].mxu0
    %247 = vdwg.mxu0
    %v248 = vld [vmem:[#allocation7] sm:$0xff]
    %v249 = vld [vmem:[#allocation7 + $0x8] sm:$0xff]
    %v250 = vadd.f32 %v242, %v248
    %v251 = vadd.f32 %v245, %v249
    %252 = vst [vmem:[#allocation8] sm:$0xff] %v250
    %253 = vst [vmem:[#allocation8 + $0x8] sm:$0xff] %v251
    // Predicated region
    $region30: #{tpu_custom_call.1} parent=1 // pred_check
      _
    $region31: #{tpu_custom_call.1} parent=1 // pred_check_branch
      %255 = sbr.rel (0) target = $region33
    $region32: #{tpu_custom_call.1} parent=1 // pred_region
      %s257 = ssub.s32 256, 256
      %258 = vsyncadd [#allocation4], %s257
      %s259 = sshll.u32 [#allocation8], 4
      %s260 = int_to_ptr.vmem [resolvable:$true] %s259
      %265 = dma.vmem_to_hbm [thread:$0]  %s260, 256, %s4, [#allocation4], 128, 128, 8
    $region33: #{tpu_custom_call.1} parent=1 // pred_fallthru
      _
    // Predicated region
    $region34: #{tpu_custom_call.1} parent=1 // pred_check
      _
    $region35: #{tpu_custom_call.1} parent=1 // pred_check_branch
      %267 = sbr.rel (0) target = $region37
    $region36: #{tpu_custom_call.1} parent=1 // pred_region
      %268 = dma.done [#allocation4], 256
    $region37: #{tpu_custom_call.1} parent=1 // pred_fallthru
      _
    %269 = vsyncpa [#allocation3], 1
    %270 = vsyncpa [#allocation6], 1
    %271 = vsyncpa [#allocation4], 1

</llo_original>
